<compile_context>
chip_gen: v6e
topology: v6e:2x2x1
jax: 0.10.0
libtpu: 0.0.40
codegen_flags: <defaults>
</compile_context>

<pallas_src>
import functools
import math

import jax
import jax.numpy as jnp
from jax import lax
from jax.experimental import pallas as pl
from jax.experimental.pallas import tpu as pltpu

D_MODEL = 32
NHEAD = 4
DIM_FF = 64
EPS = 1e-5

_VMEM = pl.BlockSpec(memory_space=pltpu.MemorySpace.VMEM)


# ----------------------------------------------------------------------------
# In-kernel helpers (traced inside the fused kernel body)
# ----------------------------------------------------------------------------
def _bn(y, gamma, beta):
    """_BatchNorm1d math: per-channel normalization over axis 0 (length*batch),
    batch statistics, biased variance.  Two-pass (mean, then centered var)."""
    mean = jnp.mean(y, axis=0, keepdims=True)
    var = jnp.mean(jnp.square(y - mean), axis=0, keepdims=True)
    return (y - mean) * lax.rsqrt(var + EPS) * gamma + beta


def _head_batch_mask(nhead, nb, lq, lk):
    """Additive mask over head-stacked rows/cols.

    Rows are ordered (head, batch, query_pos), cols (head, batch, key_pos).
    0 where head and batch match, -1e30 otherwise.  Built from iota + a
    float multiply/truncate (avoids vector integer division)."""
    nq, nk = nb * lq, nb * lk
    rows, cols = nhead * nq, nhead * nk
    ri = lax.broadcasted_iota(jnp.int32, (rows, cols), 0).astype(jnp.float32)
    ci = lax.broadcasted_iota(jnp.int32, (rows, cols), 1).astype(jnp.float32)
    # block id = head * nb + batch  (same encoding for rows and cols)
    r_blk = ((ri + 0.5) * (1.0 / lq)).astype(jnp.int32)
    c_blk = ((ci + 0.5) * (1.0 / lk)).astype(jnp.int32)
    return jnp.where(r_blk == c_blk, 0.0, -1e30).astype(jnp.float32)


def _mha(q_in, k_in, v_in, mask, in_w_ref, in_b_ref, out_w_ref, out_b_ref,
         nhead):
    """nn.MultiheadAttention (eval) on batch-major 2D activations.

    q_in:[NQ,D] k_in,v_in:[NK,D]; mask:[H*NQ,H*NK] additive head/batch block
    mask; in_w:[D,3D], in_b:[1,3D], out_w:[D,D], out_b:[1,D]."""
    nq, d = q_in.shape
    dh = d // nhead
    scale = 1.0 / math.sqrt(dh)

    in_w = in_w_ref[...]
    in_b = in_b_ref[...]

    # --- Q/K/V projections hoisted out of the head loop: 3 wide matmuls ---
    q = (jnp.dot(q_in, in_w[:, :d], preferred_element_type=jnp.float32)
         + in_b[:, :d]) * scale                                       # [NQ,D]
    k = jnp.dot(k_in, in_w[:, d:2 * d],
                preferred_element_type=jnp.float32) + in_b[:, d:2 * d]
    v = jnp.dot(v_in, in_w[:, 2 * d:],
                preferred_element_type=jnp.float32) + in_b[:, 2 * d:]

    # --- fold heads: stack per-head slices along the sublane (row) axis ---
    qs = jnp.concatenate([q[:, h * dh:(h + 1) * dh] for h in range(nhead)],
                         axis=0)                                  # [H*NQ, dh]
    ks = jnp.concatenate([k[:, h * dh:(h + 1) * dh] for h in range(nhead)],
                         axis=0)                                  # [H*NK, dh]
    vs = jnp.concatenate([v[:, h * dh:(h + 1) * dh] for h in range(nhead)],
                         axis=0)                                  # [H*NK, dh]

    # one score matmul / softmax / PV for all heads and batches
    s = lax.dot_general(qs, ks, (((1,), (1,)), ((), ())),
                        preferred_element_type=jnp.float32) + mask
    s = s - jnp.max(s, axis=-1, keepdims=True)
    p = jnp.exp(s)
    p = p / jnp.sum(p, axis=-1, keepdims=True)        # exact softmax divide
    oh = jnp.dot(p, vs, preferred_element_type=jnp.float32)      # [H*NQ, dh]

    # Output projection folded per head:
    #   concat_h(O_h) @ W_out == sum_h O_h @ W_out[h*dh:(h+1)*dh, :]
    # (kept as an accumulation to avoid an in-kernel lane-dim concat).
    o = out_b_ref[...]
    for h in range(nhead):
        o = o + jnp.dot(oh[h * nq:(h + 1) * nq, :],
                        out_w_ref[h * dh:(h + 1) * dh, :],
                        preferred_element_type=jnp.float32)
    return o


# ----------------------------------------------------------------------------
# Fused decoder-layer kernel (single pallas_call, everything in VMEM)
# ----------------------------------------------------------------------------
def _decoder_layer_kernel(x_ref, mem_ref, qp_ref, pos_ref,
                          sa_w_ref, sa_b_ref, sa_ow_ref, sa_ob_ref,
                          ca_w_ref, ca_b_ref, ca_ow_ref, ca_ob_ref,
                          ff1w_ref, ff1b_ref, ff2w_ref, ff2b_ref,
                          g1_ref, b1_ref, g2_ref, b2_ref, g3_ref, b3_ref,
                          o_ref, *, nhead, nb, lq, lk):
    x = x_ref[...].astype(jnp.float32)        # [B*L, D]  (batch-major rows)
    mem = mem_ref[...].astype(jnp.float32)    # [B*S, D]
    qp = qp_ref[...].astype(jnp.float32)
    pos = pos_ref[...].astype(jnp.float32)

    # masks generated in-kernel (no quadratic HBM->VMEM traffic)
    m_self = _head_batch_mask(nhead, nb, lq, lq)
    m_cross = _head_batch_mask(nhead, nb, lq, lk)

    # --- self attention + residual + norm1 ---
    q_in = x + qp
    t2 = _mha(q_in, q_in, x, m_self,
              sa_w_ref, sa_b_ref, sa_ow_ref, sa_ob_ref, nhead)
    t = _bn(x + t2, g1_ref[...], b1_ref[...])

    # --- cross attention + residual + norm2 ---
    t2 = _mha(t + qp, mem + pos, mem, m_cross,
              ca_w_ref, ca_b_ref, ca_ow_ref, ca_ob_ref, nhead)
    t = _bn(t + t2, g2_ref[...], b2_ref[...])

    # --- feed forward (relu) + residual + norm3 ---
    h = jnp.maximum(
        jnp.dot(t, ff1w_ref[...], preferred_element_type=jnp.float32)
        + ff1b_ref[...], 0.0)
    t2 = jnp.dot(h, ff2w_ref[...], preferred_element_type=jnp.float32) \
        + ff2b_ref[...]
    t = _bn(t + t2, g3_ref[...], b3_ref[...])

    o_ref[...] = t.astype(o_ref.dtype)


def transformer_decoder_layer(tgt, memory, params, pos=None, query_pos=None):
    """tgt:[L,B,D], memory:[S,B,D] -> [L,B,D]; one fused Pallas kernel."""
    l, b, d = tgt.shape
    s = memory.shape[0]

    # TODO(synk): these [L,B,D] <-> batch-major transposes are host-side XLA
    # ops; keep the surrounding model batch-major to avoid the extra HBM pass.
    def to2d(t):   # [len, batch, D] -> batch-major [batch*len, D]
        return t.transpose(1, 0, 2).reshape(-1, d)

    x2, m2 = to2d(tgt), to2d(memory)
    qp2 = to2d(query_pos) if query_pos is not None else jnp.zeros_like(x2)
    pos2 = to2d(pos) if pos is not None else jnp.zeros_like(m2)

    sa, ca = params["self_attn"], params["cross_attn"]
    row = lambda v: v.reshape(1, -1)
    args = (
        x2, m2, qp2, pos2,
        # weights pre-transposed to kernel-native [Din, Dout] layout
        sa["in_proj_weight"].T, row(sa["in_proj_bias"]),
        sa["out_proj_weight"].T, row(sa["out_proj_bias"]),
        ca["in_proj_weight"].T, row(ca["in_proj_bias"]),
        ca["out_proj_weight"].T, row(ca["out_proj_bias"]),
        params["linear1_w"].T, row(params["linear1_b"]),
        params["linear2_w"].T, row(params["linear2_b"]),
        row(params["norm1_g"]), row(params["norm1_b"]),
        row(params["norm2_g"]), row(params["norm2_b"]),
        row(params["norm3_g"]), row(params["norm3_b"]),
    )

    nq, nk = b * l, b * s
    dh = d // NHEAD
    flops = (2 * nq * d * 3 * d + 2 * nq * d * d + 2 * nk * d * 2 * d
             + 4 * NHEAD * nq * (nq + nk) * dh
             + 4 * nq * d * DIM_FF)
    bytes_accessed = (sum(int(a.size) * a.dtype.itemsize for a in args)
                      + nq * d * tgt.dtype.itemsize)

    # TODO(synk): v7x megacore - a "parallel" row grid is blocked by the fused
    # BatchNorm's global (length*batch) statistics; kept grid-less (1 TC).
    out2 = pl.pallas_call(
        functools.partial(_decoder_layer_kernel,
                          nhead=NHEAD, nb=b, lq=l, lk=s),
        out_shape=jax.ShapeDtypeStruct((b * l, d), tgt.dtype),
        in_specs=[_VMEM] * len(args),
        out_specs=_VMEM,
        cost_estimate=pl.CostEstimate(
            flops=int(flops),
            transcendentals=int(NHEAD * nq * (nq + nk)),
            bytes_accessed=int(bytes_accessed)),
    )(*args)
    return out2.reshape(b, l, d).transpose(1, 0, 2)     # back to [L, B, D]


# ----------------------------------------------------------------------------
# Standalone _BatchNorm1d kernel: gridded, lane-dense, Welford/Chan combine
# ----------------------------------------------------------------------------
def _bn1d_kernel(x_ref, g_ref, b_ref, psum_ref, o_ref, mean_ref, m2_ref,
                 *, rows_per_step, pack, n_rows_total):
    phase = pl.program_id(0)   # 0: statistics pass, 1: apply pass
    j = pl.program_id(1)       # row-tile index
    n_b = float(rows_per_step * pack)      # original rows covered by one tile

    @pl.when(phase == 0)
    def _stats():
        x = x_ref[...].astype(jnp.float32)                   # [T, pack*C]
        # Two-pass within the tile -> per-tile (count, mean, M2).  psum sums
        # the `pack` lane groups of each channel and broadcasts the result
        # back, so all stats stay lane-dense [1, pack*C].
        s = jnp.dot(jnp.sum(x, axis=0, keepdims=True), psum_ref[...],
                    preferred_element_type=jnp.float32)
        m_b = s * (1.0 / n_b)
        dlt = x - m_b
        m2_b = jnp.dot(jnp.sum(dlt * dlt, axis=0, keepdims=True),
                       psum_ref[...], preferred_element_type=jnp.float32)

        @pl.when(j == 0)
        def _():
            mean_ref[...] = m_b
            m2_ref[...] = m2_b

        @pl.when(j > 0)
        def _():
            # Chan parallel combine of (n, mean, M2); avoids E[x^2]-mean^2.
            n_a = j.astype(jnp.float32) * n_b
            n_ab = n_a + n_b
            delta = m_b - mean_ref[...]
            mean_ref[...] = mean_ref[...] + delta * (n_b / n_ab)
            m2_ref[...] = m2_ref[...] + m2_b + delta * delta * (n_a * (n_b / n_ab))

    @pl.when(phase == 1)
    def _apply():
        x = x_ref[...].astype(jnp.float32)
        var = m2_ref[...] * (1.0 / float(n_rows_total))      # biased variance
        rstd = lax.rsqrt(var + EPS)
        o_ref[...] = ((x - mean_ref[...]) * rstd * g_ref[...]
                      + b_ref[...]).astype(o_ref.dtype)


def _pick_row_tile(rows, row_bytes):
    """Largest divisor of `rows` that is a multiple of 8 (or `rows` itself),
    capped so one block stays well under the scoped VMEM budget."""
    cap = max(8, min(1024, (2 * 1024 * 1024) // max(row_bytes, 1)))
    cap = min(cap, rows)
    for cand in range(cap, 0, -1):
        if rows % cand == 0 and (cand % 8 == 0 or cand == rows):
            return cand
    return rows


def batch_norm_1d(x, gamma, beta):
    """_BatchNorm1d.forward: x [length, batch, channels] -> same shape."""
    l, b, c = x.shape
    n = l * b

    # Lane-dense packing: view [n, c] as [n//pack, pack*c] (row-major reshape,
    # free outside the kernel) so loads/stores use full 128-lane vregs.
    pack = 1
    if c < 128 and 128 % c == 0 and n % (128 // c) == 0:
        pack = 128 // c
    cp = pack * c
    rows = n // pack

    tile_rows = _pick_row_tile(rows, cp * x.dtype.itemsize)
    n_tiles = rows // tile_rows

    xp = x.reshape(rows, cp)
    g = jnp.tile(gamma.reshape(1, c).astype(jnp.float32), (1, pack))
    bt = jnp.tile(beta.reshape(1, c).astype(jnp.float32), (1, pack))
    lane = jnp.arange(cp, dtype=jnp.int32)
    psum = (lane[:, None] % c == lane[None, :] % c).astype(jnp.float32)

    kern = functools.partial(_bn1d_kernel, rows_per_step=tile_rows, pack=pack,
                             n_rows_total=n)
    yp = pl.pallas_call(
        kern,
        out_shape=jax.ShapeDtypeStruct((rows, cp), x.dtype),
        grid_spec=pltpu.PrefetchScalarGridSpec(
            num_scalar_prefetch=0,
            grid=(2, n_tiles),                       # (phase, row tiles)
            in_specs=[pl.BlockSpec((tile_rows, cp), lambda p, j: (j, 0)),
                      pl.BlockSpec((1, cp), lambda p, j: (0, 0)),
                      pl.BlockSpec((1, cp), lambda p, j: (0, 0)),
                      pl.BlockSpec((cp, cp), lambda p, j: (0, 0))],
            out_specs=pl.BlockSpec((tile_rows, cp), lambda p, j: (j, 0)),
            scratch_shapes=[pltpu.VMEM((1, cp), jnp.float32),
                            pltpu.VMEM((1, cp), jnp.float32)]),
        compiler_params=pltpu.CompilerParams(
            dimension_semantics=("arbitrary", "arbitrary")),
        cost_estimate=pl.CostEstimate(
            flops=int(16 * n * c), transcendentals=int(cp),
            bytes_accessed=int(3 * n * c * x.dtype.itemsize)),
    )(xp, g, bt, psum)
    return yp.reshape(l, b, c)


# ----------------------------------------------------------------------------
# Pure-JAX reference (same math, no Pallas) for sanity checks
# ----------------------------------------------------------------------------
def _ref_mha(query, key, value, p, nhead):
    l, b, d = query.shape
    s = key.shape[0]
    dh = d // nhead
    in_w, in_b = p["in_proj_weight"], p["in_proj_bias"]
    q = query.reshape(l * b, d) @ in_w[:d].T + in_b[:d]
    k = key.reshape(s * b, d) @ in_w[d:2 * d].T + in_b[d:2 * d]
    v = value.reshape(s * b, d) @ in_w[2 * d:].T + in_b[2 * d:]
    q = q.reshape(l, b * nhead, dh).transpose(1, 0, 2) / math.sqrt(dh)
    k = k.reshape(s, b * nhead, dh).transpose(1, 0, 2)
    v = v.reshape(s, b * nhead, dh).transpose(1, 0, 2)
    sc = jnp.einsum("bld,bsd->bls", q, k)
    pa = jax.nn.softmax(sc, axis=-1)
    o = jnp.einsum("bls,bsd->bld", pa, v).transpose(1, 0, 2).reshape(l * b, d)
    o = o @ p["out_proj_weight"].T + p["out_proj_bias"]
    return o.reshape(l, b, d)


def _ref_bn(y, g, bta):
    m = jnp.mean(y, axis=0, keepdims=True)
    v = jnp.mean((y - m) ** 2, axis=0, keepdims=True)
    return (y - m) / jnp.sqrt(v + EPS) * g + bta


def _ref_layer(tgt, memory, params, pos, query_pos):
    l, b, d = tgt.shape
    q = tgt + query_pos
    t2 = _ref_mha(q, q, tgt, params["self_attn"], NHEAD)
    t = _ref_bn((tgt + t2).reshape(l * b, d),
                params["norm1_g"], params["norm1_b"]).reshape(l, b, d)
    t2 = _ref_mha(t + query_pos, memory + pos, memory,
                  params["cross_attn"], NHEAD)
    t = _ref_bn((t + t2).reshape(l * b, d),
                params["norm2_g"], params["norm2_b"]).reshape(l, b, d)
    h = jnp.maximum(t.reshape(l * b, d) @ params["linear1_w"].T
                    + params["linear1_b"], 0.0)
    t2 = h @ params["linear2_w"].T + params["linear2_b"]
    t = _ref_bn(t.reshape(l * b, d) + t2,
                params["norm3_g"], params["norm3_b"]).reshape(l, b, d)
    return t


# ----------------------------------------------------------------------------
def make_params(key, d_model=D_MODEL, dim_ff=DIM_FF):
    ks = jax.random.split(key, 18)

    def nrm(k, shape, sc=0.05):
        return (sc * jax.random.normal(k, shape)).astype(jnp.float32)

    def attn_params(k0, k1, k2, k3):
        return {
            "in_proj_weight": nrm(k0, (3 * d_model, d_model)),
            "in_proj_bias": nrm(k1, (3 * d_model,)),
            "out_proj_weight": nrm(k2, (d_model, d_model)),
            "out_proj_bias": nrm(k3, (d_model,)),
        }

    return {
        "self_attn": attn_params(ks[0], ks[1], ks[2], ks[3]),
        "cross_attn": attn_params(ks[4], ks[5], ks[6], ks[7]),
        "linear1_w": nrm(ks[8], (dim_ff, d_model)),
        "linear1_b": nrm(ks[9], (dim_ff,)),
        "linear2_w": nrm(ks[10], (d_model, dim_ff)),
        "linear2_b": nrm(ks[11], (d_model,)),
        "norm1_g": 1.0 + nrm(ks[12], (d_model,)),
        "norm1_b": nrm(ks[13], (d_model,)),
        "norm2_g": 1.0 + nrm(ks[14], (d_model,)),
        "norm2_b": nrm(ks[15], (d_model,)),
        "norm3_g": 1.0 + nrm(ks[16], (d_model,)),
        "norm3_b": nrm(ks[17], (d_model,)),
    }


if __name__ == "__main__":
    key = jax.random.PRNGKey(0)
    k_tgt, k_mem, k_qp, k_pos, k_par = jax.random.split(key, 5)

    L, S, B = 8, 16, 2   # tgt length, memory length, batch
    tgt = jax.random.normal(k_tgt, (L, B, D_MODEL), dtype=jnp.float32)
    memory = jax.random.normal(k_mem, (S, B, D_MODEL), dtype=jnp.float32)
    query_pos = jax.random.normal(k_qp, (L, B, D_MODEL), dtype=jnp.float32)
    pos = jax.random.normal(k_pos, (S, B, D_MODEL), dtype=jnp.float32)
    params = make_params(k_par)

    # --- standalone _BatchNorm1d kernel (the spec module) ---
    bn_out = jax.block_until_ready(
        jax.jit(batch_norm_1d)(tgt, params["norm1_g"], params["norm1_b"]))
    bn_ref = _ref_bn(tgt.reshape(L * B, D_MODEL),
                     params["norm1_g"], params["norm1_b"]).reshape(L, B, D_MODEL)
    assert bn_out.shape == (L, B, D_MODEL)
    assert jnp.allclose(bn_out, bn_ref, atol=1e-4, rtol=1e-4), "BN mismatch"

    # --- fused decoder layer (single pallas_call) ---
    fwd = jax.jit(
        lambda t, m, p, qp: transformer_decoder_layer(t, m, params, p, qp))
    out = jax.block_until_ready(fwd(tgt, memory, pos, query_pos))
    ref = _ref_layer(tgt, memory, params, pos, query_pos)
    assert out.shape == (L, B, D_MODEL)
    assert jnp.allclose(out, ref, atol=2e-3, rtol=2e-3), "layer mismatch"

    print("KERNEL_OK")
</pallas_src>

<mosaic_0001>
module attributes {stable_mosaic.version = 11 : i64} {
  func.func @_bn1d_kernel(%arg0: i32, %arg1: i32, %arg2: memref<4x128xf32, #tpu.memory_space<vmem>>, %arg3: memref<1x128xf32, #tpu.memory_space<vmem>>, %arg4: memref<1x128xf32, #tpu.memory_space<vmem>>, %arg5: memref<128x128xf32, #tpu.memory_space<vmem>>, %arg6: memref<4x128xf32, #tpu.memory_space<vmem>>, %arg7: memref<1x128xf32, #tpu.memory_space<vmem>>, %arg8: memref<1x128xf32, #tpu.memory_space<vmem>>) attributes {dimension_semantics = [#tpu.dimension_semantics<arbitrary>, #tpu.dimension_semantics<arbitrary>], iteration_bounds = array<i64: 2, 1>, scalar_prefetch = 0 : i64, scratch_operands = 2 : i64, tpu.core_type = #tpu.core_type<tc>, window_params = [{transform_indices = @transform_0, window_bounds = array<i64: 4, 128>}, {pipeline_mode = #tpu.pipeline_mode<synchronous>, transform_indices = @transform_1, window_bounds = array<i64: 1, 128>}, {pipeline_mode = #tpu.pipeline_mode<synchronous>, transform_indices = @transform_2, window_bounds = array<i64: 1, 128>}, {pipeline_mode = #tpu.pipeline_mode<synchronous>, transform_indices = @transform_3, window_bounds = array<i64: 128, 128>}, {transform_indices = @transform_4, window_bounds = array<i64: 4, 128>}]} {
    %c0_i32 = arith.constant 0 : i32
    %0 = arith.cmpi eq, %arg0, %c0_i32 : i32
    %1 = arith.extui %0 : i1 to i32
    %c0_i32_0 = arith.constant 0 : i32
    %2 = arith.cmpi ne, %1, %c0_i32_0 : i32
    scf.if %2 {
      %c0 = arith.constant 0 : index
      %c0_2 = arith.constant 0 : index
      %6 = vector.load %arg2[%c0, %c0_2] : memref<4x128xf32, #tpu.memory_space<vmem>>, vector<4x128xf32>
      %cst = arith.constant dense<0.000000e+00> : vector<128xf32>
      %7 = vector.multi_reduction <add>, %6, %cst [0] : vector<4x128xf32> to vector<128xf32>
      %8 = vector.shape_cast %7 : vector<128xf32> to vector<1x128xf32>
      %c0_3 = arith.constant 0 : index
      %c0_4 = arith.constant 0 : index
      %9 = vector.load %arg5[%c0_3, %c0_4] : memref<128x128xf32, #tpu.memory_space<vmem>>, vector<128x128xf32>
      %cst_5 = arith.constant dense<0.000000e+00> : vector<1x128xf32>
      %10 = tpu.matmul %8, %9, %cst_5 {dimension_numbers = #tpu.dot_dimension_numbers<[1], [0], [0], [1], [0, 0, 1, 1], [], []>} : vector<1x128xf32>, vector<128x128xf32>, vector<1x128xf32> -> vector<1x128xf32>
      %cst_6 = arith.constant 6.250000e-02 : f32
      %11 = vector.broadcast %cst_6 : f32 to vector<1x128xf32>
      %12 = arith.mulf %10, %11 : vector<1x128xf32>
      %13 = vector.broadcast %12 : vector<1x128xf32> to vector<4x128xf32>
      %14 = arith.subf %6, %13 : vector<4x128xf32>
      %15 = arith.mulf %14, %14 : vector<4x128xf32>
      %cst_7 = arith.constant dense<0.000000e+00> : vector<128xf32>
      %16 = vector.multi_reduction <add>, %15, %cst_7 [0] : vector<4x128xf32> to vector<128xf32>
      %17 = vector.shape_cast %16 : vector<128xf32> to vector<1x128xf32>
      %c0_8 = arith.constant 0 : index
      %c0_9 = arith.constant 0 : index
      %18 = vector.load %arg5[%c0_8, %c0_9] : memref<128x128xf32, #tpu.memory_space<vmem>>, vector<128x128xf32>
      %cst_10 = arith.constant dense<0.000000e+00> : vector<1x128xf32>
      %19 = tpu.matmul %17, %18, %cst_10 {dimension_numbers = #tpu.dot_dimension_numbers<[1], [0], [0], [1], [0, 0, 1, 1], [], []>} : vector<1x128xf32>, vector<128x128xf32>, vector<1x128xf32> -> vector<1x128xf32>
      %c0_i32_11 = arith.constant 0 : i32
      %20 = arith.cmpi eq, %arg1, %c0_i32_11 : i32
      %21 = arith.extui %20 : i1 to i32
      %c0_i32_12 = arith.constant 0 : i32
      %22 = arith.cmpi ne, %21, %c0_i32_12 : i32
      scf.if %22 {
        %c0_15 = arith.constant 0 : index
        %c0_16 = arith.constant 0 : index
        %26 = vector.load %arg7[%c0_15, %c0_16] : memref<1x128xf32, #tpu.memory_space<vmem>>, vector<1x128xf32>
        tpu.vector_store %arg7[%c0_15, %c0_16], %12 {strides = array<i32>} : memref<1x128xf32, #tpu.memory_space<vmem>>, vector<1x128xf32>,
        %c0_17 = arith.constant 0 : index
        %c0_18 = arith.constant 0 : index
        %27 = vector.load %arg8[%c0_17, %c0_18] : memref<1x128xf32, #tpu.memory_space<vmem>>, vector<1x128xf32>
        tpu.vector_store %arg8[%c0_17, %c0_18], %19 {strides = array<i32>} : memref<1x128xf32, #tpu.memory_space<vmem>>, vector<1x128xf32>,
      } else {
      }
      %c0_i32_13 = arith.constant 0 : i32
      %23 = arith.cmpi sgt, %arg1, %c0_i32_13 : i32
      %24 = arith.extui %23 : i1 to i32
      %c0_i32_14 = arith.constant 0 : i32
      %25 = arith.cmpi ne, %24, %c0_i32_14 : i32
      scf.if %25 {
        %26 = arith.sitofp %arg1 : i32 to f32
        %cst_15 = arith.constant 1.600000e+01 : f32
        %27 = arith.mulf %26, %cst_15 : f32
        %cst_16 = arith.constant 1.600000e+01 : f32
        %28 = arith.addf %27, %cst_16 : f32
        %c0_17 = arith.constant 0 : index
        %c0_18 = arith.constant 0 : index
        %29 = vector.load %arg7[%c0_17, %c0_18] : memref<1x128xf32, #tpu.memory_space<vmem>>, vector<1x128xf32>
        %30 = arith.subf %12, %29 : vector<1x128xf32>
        %c0_19 = arith.constant 0 : index
        %c0_20 = arith.constant 0 : index
        %31 = vector.load %arg7[%c0_19, %c0_20] : memref<1x128xf32, #tpu.memory_space<vmem>>, vector<1x128xf32>
        %cst_21 = arith.constant 1.600000e+01 : f32
        %32 = arith.divf %cst_21, %28 : f32
        %33 = vector.broadcast %32 : f32 to vector<1x128xf32>
        %34 = arith.mulf %30, %33 : vector<1x128xf32>
        %35 = arith.addf %31, %34 : vector<1x128xf32>
        %c0_22 = arith.constant 0 : index
        %c0_23 = arith.constant 0 : index
        %36 = vector.load %arg7[%c0_22, %c0_23] : memref<1x128xf32, #tpu.memory_space<vmem>>, vector<1x128xf32>
        tpu.vector_store %arg7[%c0_22, %c0_23], %35 {strides = array<i32>} : memref<1x128xf32, #tpu.memory_space<vmem>>, vector<1x128xf32>,
        %c0_24 = arith.constant 0 : index
        %c0_25 = arith.constant 0 : index
        %37 = vector.load %arg8[%c0_24, %c0_25] : memref<1x128xf32, #tpu.memory_space<vmem>>, vector<1x128xf32>
        %38 = arith.addf %37, %19 : vector<1x128xf32>
        %39 = arith.mulf %30, %30 : vector<1x128xf32>
        %cst_26 = arith.constant 1.600000e+01 : f32
        %40 = arith.divf %cst_26, %28 : f32
        %41 = arith.mulf %27, %40 : f32
        %42 = vector.broadcast %41 : f32 to vector<1x128xf32>
        %43 = arith.mulf %39, %42 : vector<1x128xf32>
        %44 = arith.addf %38, %43 : vector<1x128xf32>
        %c0_27 = arith.constant 0 : index
        %c0_28 = arith.constant 0 : index
        %45 = vector.load %arg8[%c0_27, %c0_28] : memref<1x128xf32, #tpu.memory_space<vmem>>, vector<1x128xf32>
        tpu.vector_store %arg8[%c0_27, %c0_28], %44 {strides = array<i32>} : memref<1x128xf32, #tpu.memory_space<vmem>>, vector<1x128xf32>,
      } else {
      }
    } else {
    }
    %c1_i32 = arith.constant 1 : i32
    %3 = arith.cmpi eq, %arg0, %c1_i32 : i32
    %4 = arith.extui %3 : i1 to i32
    %c0_i32_1 = arith.constant 0 : i32
    %5 = arith.cmpi ne, %4, %c0_i32_1 : i32
    scf.if %5 {
      %c0 = arith.constant 0 : index
      %c0_2 = arith.constant 0 : index
      %6 = vector.load %arg2[%c0, %c0_2] : memref<4x128xf32, #tpu.memory_space<vmem>>, vector<4x128xf32>
      %c0_3 = arith.constant 0 : index
      %c0_4 = arith.constant 0 : index
      %7 = vector.load %arg8[%c0_3, %c0_4] : memref<1x128xf32, #tpu.memory_space<vmem>>, vector<1x128xf32>
      %cst = arith.constant 6.250000e-02 : f32
      %8 = vector.broadcast %cst : f32 to vector<1x128xf32>
      %9 = arith.mulf %7, %8 : vector<1x128xf32>
      %cst_5 = arith.constant 9.99999974E-6 : f32
      %10 = vector.broadcast %cst_5 : f32 to vector<1x128xf32>
      %11 = arith.addf %9, %10 : vector<1x128xf32>
      %12 = math.rsqrt %11 : vector<1x128xf32>
      %c0_6 = arith.constant 0 : index
      %c0_7 = arith.constant 0 : index
      %13 = vector.load %arg7[%c0_6, %c0_7] : memref<1x128xf32, #tpu.memory_space<vmem>>, vector<1x128xf32>
      %14 = vector.broadcast %13 : vector<1x128xf32> to vector<4x128xf32>
      %15 = arith.subf %6, %14 : vector<4x128xf32>
      %16 = vector.broadcast %12 : vector<1x128xf32> to vector<4x128xf32>
      %17 = arith.mulf %15, %16 : vector<4x128xf32>
      %c0_8 = arith.constant 0 : index
      %c0_9 = arith.constant 0 : index
      %18 = vector.load %arg3[%c0_8, %c0_9] : memref<1x128xf32, #tpu.memory_space<vmem>>, vector<1x128xf32>
      %19 = vector.broadcast %18 : vector<1x128xf32> to vector<4x128xf32>
      %20 = arith.mulf %17, %19 : vector<4x128xf32>
      %c0_10 = arith.constant 0 : index
      %c0_11 = arith.constant 0 : index
      %21 = vector.load %arg4[%c0_10, %c0_11] : memref<1x128xf32, #tpu.memory_space<vmem>>, vector<1x128xf32>
      %22 = vector.broadcast %21 : vector<1x128xf32> to vector<4x128xf32>
      %23 = arith.addf %20, %22 : vector<4x128xf32>
      %c0_12 = arith.constant 0 : index
      %c0_13 = arith.constant 0 : index
      %24 = vector.load %arg6[%c0_12, %c0_13] : memref<4x128xf32, #tpu.memory_space<vmem>>, vector<4x128xf32>
      tpu.vector_store %arg6[%c0_12, %c0_13], %23 {strides = array<i32>} : memref<4x128xf32, #tpu.memory_space<vmem>>, vector<4x128xf32>,
    } else {
    }
    return
  }
  func.func @transform_0(%arg0: i32, %arg1: i32) -> (i32, i32) {
    %c0_i32 = arith.constant 0 : i32
    %c0_i32_0 = arith.constant 0 : i32
    return %arg1, %c0_i32 : i32, i32
  }
  func.func @transform_1(%arg0: i32, %arg1: i32) -> (i32, i32) {
    %c0_i32 = arith.constant 0 : i32
    %c0_i32_0 = arith.constant 0 : i32
    %c0_i32_1 = arith.constant 0 : i32
    return %c0_i32, %c0_i32_0 : i32, i32
  }
  func.func @transform_2(%arg0: i32, %arg1: i32) -> (i32, i32) {
    %c0_i32 = arith.constant 0 : i32
    %c0_i32_0 = arith.constant 0 : i32
    %c0_i32_1 = arith.constant 0 : i32
    return %c0_i32, %c0_i32_0 : i32, i32
  }
  func.func @transform_3(%arg0: i32, %arg1: i32) -> (i32, i32) {
    %c0_i32 = arith.constant 0 : i32
    %c0_i32_0 = arith.constant 0 : i32
    %c0_i32_1 = arith.constant 0 : i32
    return %c0_i32, %c0_i32_0 : i32, i32
  }
  func.func @transform_4(%arg0: i32, %arg1: i32) -> (i32, i32) {
    %c0_i32 = arith.constant 0 : i32
    %c0_i32_0 = arith.constant 0 : i32
    return %arg1, %c0_i32 : i32, i32
  }
}

</mosaic_0001>

<llo_original>
// kernel: batch_norm_1d.1
$region0: #{batch_norm_1d.1}
  #allocation0 [shape = 'u32[]', space=smem, size = 0x4, offset = 0x4, fixed_abs, tag = 'smem constant byte address 0x4 - core index']
  #allocation1 [shape = 'u32[144,128]{1,0:T(1,128)}', space=vmem, size = 0x12000, scoped, tag = 'internal scratch']
  #allocation2 [shape = 'f32[1,128]{1,0:T(1,128)}', space=vmem, size = 0x200, scoped, tag = 'scratch operand']
  #allocation3 [shape = 'f32[1,128]{1,0:T(1,128)}', space=vmem, size = 0x200, scoped, tag = 'scratch operand']
  %s0 = inlined_call_operand.vmem [shape: f32[4,128], index: 0, kind: input, shape index: {}]
  %s1 = inlined_call_operand.vmem [shape: f32[1,128], index: 1, kind: input, shape index: {}]
  %s2 = inlined_call_operand.vmem [shape: f32[1,128], index: 2, kind: input, shape index: {}]
  %s3 = inlined_call_operand.vmem [shape: f32[128,128], index: 3, kind: input, shape index: {}]
  %s4 = inlined_call_operand.vmem [shape: f32[4,128], index: 4, kind: output, shape index: {}]
  %s5 = sld [smem:[#allocation0]]
  $region65: #{batch_norm_1d.1} parent=0
    _
  %s7 = ssub.s32 1, %s5
  %s8 = scalar_select 0, %s7, %s5
  loop: start=0, step=1, limit=4
  $region2: #{batch_norm_1d.1} parent=0 // loop_pre_header
    _
  $region3: #{batch_norm_1d.1} parent=0 // loop_header
    %s10 = sphi 0, %s14
    %p11 = scmp.ge.s32.totalorder %s10, 4
    %s17 = sphi 0, %s29
    %s18 = sphi 0, %s25
    %s19 = sphi 0, %s17
    %s20 = sphi 0, %s18
    %s21 = sphi 0, %s19
    %s22 = sphi 0, %s20
    %s32 = sphi 0, %s34
    %s35 = sphi 0, %s32
    %s36 = sphi 0, %s35
    %s52 = sphi 0, %s36
    %s56 = sphi 0, %s56
    %s58 = sphi 0, %s56
    %s59 = sphi 0, %s58
    %s73 = sphi 0, %s59
    %s77 = sphi 0, %s77
    %s79 = sphi 0, %s77
    %s80 = sphi 0, %s79
    %s94 = sphi 0, %s80
    %s98 = sphi 0, %s98
    %s100 = sphi 0, %s98
    %s101 = sphi 0, %s100
    %s115 = sphi 0, %s101
    %s121 = sphi 0, %s123
    %s124 = sphi 0, %s121
    %s125 = sphi 0, %s124
    %s141 = sphi 0, %s125
  $region4: #{batch_norm_1d.1} parent=0 // loop_header_branch
    %13 = sbr.rel (%p11) target = $region8
  $region5: #{batch_norm_1d.1} parent=0 // loop_body
    %s15 = ssub.s32 %s10, 1
    %s16 = ssub.s32 %s10, 2
    %s23 = sadd.s32 1, %s18
    %p24 = scmp.ge.s32.totalorder %s23, 1
    %s25 = scalar_select %p24, 0, %s23
    %s26 = sadd.s32 1, %s17
    %s27 = scalar_select %p24, %s26, %s17
    %p28 = scmp.ge.s32.totalorder %s27, 2
    %s29 = scalar_select %p28, 0, %s27
    %s30 = ssub.s32 %s18, %s25
    %p31 = scmp.eq.s32.totalorder %s30, 0
    %s33 = sadd.s32 %s32, 1
    %s34 = scalar_select %p31, %s32, %s33
    %p37 = pneg %p31
    %p38 = scmp.eq.s32.totalorder %s10, 1
    %p39 = por %p37, %p38
    %p40 = scmp.ne.s32.totalorder %s32, %s35
    %p41 = scmp.eq.s32.totalorder %s10, 0
    %p42 = por %p40, %p41
    %p43 = scmp.ne.s32.totalorder %s32, %s35
    %p44 = scmp.eq.s32.totalorder %s15, 1
    %p45 = por %p43, %p44
    %p46 = scmp.ne.s32.totalorder %s35, %s36
    %p47 = scmp.eq.s32.totalorder %s15, 0
    %p48 = por %p46, %p47
    %p49 = scmp.ne.s32.totalorder %s35, %s36
    %p50 = scmp.eq.s32.totalorder %s16, 1
    %p51 = por %p49, %p50
    %p53 = scmp.ne.s32.totalorder %s36, %s52
    %p54 = scmp.eq.s32.totalorder %s16, 0
    %p55 = por %p53, %p54
    %s57 = sadd.s32 %s56, 1
    %p60 = scmp.eq.s32.totalorder %s10, 1
    %p61 = scmp.ne.s32.totalorder %s56, %s58
    %p62 = scmp.eq.s32.totalorder %s10, 0
    %p63 = por %p61, %p62
    %p64 = scmp.ne.s32.totalorder %s56, %s58
    %p65 = scmp.eq.s32.totalorder %s15, 1
    %p66 = por %p64, %p65
    %p67 = scmp.ne.s32.totalorder %s58, %s59
    %p68 = scmp.eq.s32.totalorder %s15, 0
    %p69 = por %p67, %p68
    %p70 = scmp.ne.s32.totalorder %s58, %s59
    %p71 = scmp.eq.s32.totalorder %s16, 1
    %p72 = por %p70, %p71
    %p74 = scmp.ne.s32.totalorder %s59, %s73
    %p75 = scmp.eq.s32.totalorder %s16, 0
    %p76 = por %p74, %p75
    %s78 = sadd.s32 %s77, 1
    %p81 = scmp.eq.s32.totalorder %s10, 1
    %p82 = scmp.ne.s32.totalorder %s77, %s79
    %p83 = scmp.eq.s32.totalorder %s10, 0
    %p84 = por %p82, %p83
    %p85 = scmp.ne.s32.totalorder %s77, %s79
    %p86 = scmp.eq.s32.totalorder %s15, 1
    %p87 = por %p85, %p86
    %p88 = scmp.ne.s32.totalorder %s79, %s80
    %p89 = scmp.eq.s32.totalorder %s15, 0
    %p90 = por %p88, %p89
    %p91 = scmp.ne.s32.totalorder %s79, %s80
    %p92 = scmp.eq.s32.totalorder %s16, 1
    %p93 = por %p91, %p92
    %p95 = scmp.ne.s32.totalorder %s80, %s94
    %p96 = scmp.eq.s32.totalorder %s16, 0
    %p97 = por %p95, %p96
    %s99 = sadd.s32 %s98, 1
    %p102 = scmp.eq.s32.totalorder %s10, 1
    %p103 = scmp.ne.s32.totalorder %s98, %s100
    %p104 = scmp.eq.s32.totalorder %s10, 0
    %p105 = por %p103, %p104
    %p106 = scmp.ne.s32.totalorder %s98, %s100
    %p107 = scmp.eq.s32.totalorder %s15, 1
    %p108 = por %p106, %p107
    %p109 = scmp.ne.s32.totalorder %s100, %s101
    %p110 = scmp.eq.s32.totalorder %s15, 0
    %p111 = por %p109, %p110
    %p112 = scmp.ne.s32.totalorder %s100, %s101
    %p113 = scmp.eq.s32.totalorder %s16, 1
    %p114 = por %p112, %p113
    %p116 = scmp.ne.s32.totalorder %s101, %s115
    %p117 = scmp.eq.s32.totalorder %s16, 0
    %p118 = por %p116, %p117
    %s119 = ssub.s32 %s18, %s25
    %p120 = scmp.eq.s32.totalorder %s119, 0
    %s122 = sadd.s32 %s121, 1
    %s123 = scalar_select %p120, %s121, %s122
    %p126 = pneg %p120
    %p127 = scmp.eq.s32.totalorder %s10, 1
    %p128 = por %p126, %p127
    %p129 = scmp.ne.s32.totalorder %s121, %s124
    %p130 = scmp.eq.s32.totalorder %s10, 0
    %p131 = por %p129, %p130
    %p132 = scmp.ne.s32.totalorder %s121, %s124
    %p133 = scmp.eq.s32.totalorder %s15, 1
    %p134 = por %p132, %p133
    %p135 = scmp.ne.s32.totalorder %s124, %s125
    %p136 = scmp.eq.s32.totalorder %s15, 0
    %p137 = por %p135, %p136
    %p138 = scmp.ne.s32.totalorder %s124, %s125
    %p139 = scmp.eq.s32.totalorder %s16, 1
    %p140 = por %p138, %p139
    %p142 = scmp.ne.s32.totalorder %s125, %s141
    %p143 = scmp.eq.s32.totalorder %s16, 0
    %p144 = por %p142, %p143
    %p145 = scmp.le.s32.totalorder 1, %s10
    %p146 = scmp.lt.s32.totalorder %s10, 3
    %p147 = pnand %p145, %p146
    %p148 = pneg %p147
    // Predicated region
    $region9: #{batch_norm_1d.1} parent=5 // pred_check
      _
    $region10: #{batch_norm_1d.1} parent=5 // pred_check_branch
      %150 = sbr.rel (%p147) target = $region12
    $region11: #{batch_norm_1d.1} parent=5 // pred_region
      %s151 = ssub.s32 %s10, 1
      // Predicated region
      $region13: #{batch_norm_1d.1} parent=11 // pred_check
        %p152 = pneg %p48
      $region14: #{batch_norm_1d.1} parent=11 // pred_check_branch
        %154 = sbr.rel (%p152) target = $region16
      $region15: #{batch_norm_1d.1} parent=11 // pred_region
        %p155 = scmp.lt.s32.totalorder %s20, 0
        %s156 = scalar_select %p155, %s20, 0
        %s157 = smul.addr %s156, 4
        %s158 = scalar_lea.vmem %s0, %s157
      $region16: #{batch_norm_1d.1} parent=11 // pred_fallthru
        _
      // Predicated region
      $region17: #{batch_norm_1d.1} parent=11 // pred_check
        %p159 = pneg %p69
      $region18: #{batch_norm_1d.1} parent=11 // pred_check_branch
        %161 = sbr.rel (%p159) target = $region20
      $region19: #{batch_norm_1d.1} parent=11 // pred_region
        _
      $region20: #{batch_norm_1d.1} parent=11 // pred_fallthru
        _
      // Predicated region
      $region21: #{batch_norm_1d.1} parent=11 // pred_check
        %p162 = pneg %p90
      $region22: #{batch_norm_1d.1} parent=11 // pred_check_branch
        %164 = sbr.rel (%p162) target = $region24
      $region23: #{batch_norm_1d.1} parent=11 // pred_region
        _
      $region24: #{batch_norm_1d.1} parent=11 // pred_fallthru
        _
      // Predicated region
      $region25: #{batch_norm_1d.1} parent=11 // pred_check
        %p165 = pneg %p111
      $region26: #{batch_norm_1d.1} parent=11 // pred_check_branch
        %167 = sbr.rel (%p165) target = $region28
      $region27: #{batch_norm_1d.1} parent=11 // pred_region
        _
      $region28: #{batch_norm_1d.1} parent=11 // pred_fallthru
        _
    $region12: #{batch_norm_1d.1} parent=5 // pred_fallthru
      _
    %p168 = scmp.lt.s32.totalorder %s10, 2
    // Predicated region
    $region29: #{batch_norm_1d.1} parent=5 // pred_check
      %p169 = pneg %p168
    $region30: #{batch_norm_1d.1} parent=5 // pred_check_branch
      %171 = sbr.rel (%p169) target = $region32
    $region31: #{batch_norm_1d.1} parent=5 // pred_region
      _
    $region32: #{batch_norm_1d.1} parent=5 // pred_fallthru
      _
    %p172 = scmp.le.s32.totalorder 1, %s10
    %p173 = scmp.lt.s32.totalorder %s10, 3
    %p174 = pnand %p172, %p173
    %p175 = pneg %p174
    // Predicated region
    $region33: #{batch_norm_1d.1} parent=5 // pred_check
      _
    $region34: #{batch_norm_1d.1} parent=5 // pred_check_branch
      %177 = sbr.rel (%p174) target = $region36
    $region35: #{batch_norm_1d.1} parent=5 // pred_region
      %s178 = ssub.s32 %s10, 1
      %p179 = scmp.lt.s32.totalorder %s20, 0
      %s180 = scalar_select %p179, %s20, 0
      %s181 = smul.addr %s180, 4
      %s182 = scalar_lea.vmem %s0, %s181
      %p183 = pneg %p48
      %p184 = pneg %p45
      %p185 = pneg %p69
      %p186 = pneg %p66
      %p187 = pneg %p90
      %p188 = pneg %p87
      %p189 = pneg %p111
      %p190 = pneg %p108
      %p191 = pneg %p137
      %p192 = pneg %p134
      %p193 = scmp.lt.s32.totalorder %s20, 0
      %s194 = scalar_select %p193, %s20, 0
      %s195 = smul.addr %s194, 4
      %s196 = scalar_lea.vmem %s4, %s195
      %p197 = scmp.lt.s32.totalorder %s20, 0
      %s198 = scalar_select %p197, %s20, 0
      %s199 = smul.addr %s198, 4
      %s200 = scalar_lea.vmem %s0, %s199
      %p201 = scmp.lt.s32.totalorder %s20, 0
      %s202 = scalar_select %p201, %s20, 0
      %s203 = smul.addr %s202, 4
      %s204 = scalar_lea.vmem %s4, %s203
      %p205 = scmp.eq.s32.totalorder %s19, 0
      // Predicated region
      $region37: #{batch_norm_1d.1} parent=35 // pred_check
        %p206 = pneg %p205
      $region38: #{batch_norm_1d.1} parent=35 // pred_check_branch
        %208 = sbr.rel (%p206) target = $region40
      $region39: #{batch_norm_1d.1} parent=35 // pred_region
        %v209 = vld [vmem:[%s200] sm:$0xf]
        %vm210 = vcmask 1043456
        %v211 = vsel %vm210, %v209, 0.0
        %v212 = vrot.slane %v211, 4
        %v213 = vadd.f32 %v211, %v212
        %v214 = vrot.slane %v213, 2
        %v215 = vadd.f32 %v213, %v214
        %v216 = vrot.slane %v215, 1
        %v217 = vadd.f32 %v215, %v216
        %v218 = vld [vmem:[%s3] sm:$0xff]
        %v219 = vld [vmem:[%s3 + $0x8] sm:$0xff]
        %v220 = vld [vmem:[%s3 + $0x10] sm:$0xff]
        %v221 = vld [vmem:[%s3 + $0x18] sm:$0xff]
        %v222 = vld [vmem:[%s3 + $0x20] sm:$0xff]
        %v223 = vld [vmem:[%s3 + $0x28] sm:$0xff]
        %v224 = vld [vmem:[%s3 + $0x30] sm:$0xff]
        %v225 = vld [vmem:[%s3 + $0x38] sm:$0xff]
        %v226 = vld [vmem:[%s3 + $0x40] sm:$0xff]
        %v227 = vld [vmem:[%s3 + $0x48] sm:$0xff]
        %v228 = vld [vmem:[%s3 + $0x50] sm:$0xff]
        %v229 = vld [vmem:[%s3 + $0x58] sm:$0xff]
        %v230 = vld [vmem:[%s3 + $0x60] sm:$0xff]
        %v231 = vld [vmem:[%s3 + $0x68] sm:$0xff]
        %v232 = vld [vmem:[%s3 + $0x70] sm:$0xff]
        %v233 = vld [vmem:[%s3 + $0x78] sm:$0xff]
        %234 = vmatprep.subr.mxu0 0.0
        %235 = vmatpush1.msra.mxu0 %v233
        %236 = vmatprep.subr.mxu0 0.0
        %237 = vmatpush1.msra.mxu0 %v232
        %238 = vmatprep.subr.mxu0 0.0
        %239 = vmatpush1.msra.mxu0 %v231
        %240 = vmatprep.subr.mxu0 0.0
        %241 = vmatpush1.msra.mxu0 %v230
        %242 = vmatprep.subr.mxu0 0.0
        %243 = vmatpush1.msra.mxu0 %v229
        %244 = vmatprep.subr.mxu0 0.0
        %245 = vmatpush1.msra.mxu0 %v228
        %246 = vmatprep.subr.mxu0 0.0
        %247 = vmatpush1.msra.mxu0 %v227
        %248 = vmatprep.subr.mxu0 0.0
        %249 = vmatpush1.msra.mxu0 %v226
        %250 = vmatprep.subr.mxu0 0.0
        %251 = vmatpush1.msra.mxu0 %v225
        %252 = vmatprep.subr.mxu0 0.0
        %253 = vmatpush1.msra.mxu0 %v224
        %254 = vmatprep.subr.mxu0 0.0
        %255 = vmatpush1.msra.mxu0 %v223
        %256 = vmatprep.subr.mxu0 0.0
        %257 = vmatpush1.msra.mxu0 %v222
        %258 = vmatprep.subr.mxu0 0.0
        %259 = vmatpush1.msra.mxu0 %v221
        %260 = vmatprep.subr.mxu0 0.0
        %261 = vmatpush1.msra.mxu0 %v220
        %262 = vmatprep.subr.mxu0 0.0
        %263 = vmatpush1.msra.mxu0 %v219
        %264 = vmatprep.subr.mxu0 0.0
        %265 = vmatpush1.msra.mxu0 %v218
        %266 = vmatprep.subr.mxu0 0.0
        %267 = vmatpush2.msra.mxu0 0.0
        %268 = vmatprep.subr.mxu0 0.0
        %269 = vmatpush2.msra.mxu0 0.0
        %270 = vmatprep.subr.mxu0 0.0
        %271 = vmatpush2.msra.mxu0 0.0
        %272 = vmatprep.subr.mxu0 0.0
        %273 = vmatpush2.msra.mxu0 0.0
        %274 = vmatprep.subr.mxu0 0.0
        %275 = vmatpush2.msra.mxu0 0.0
        %276 = vmatprep.subr.mxu0 0.0
        %277 = vmatpush2.msra.mxu0 0.0
        %278 = vmatprep.subr.mxu0 0.0
        %279 = vmatpush2.msra.mxu0 0.0
        %280 = vmatprep.subr.mxu0 0.0
        %281 = vmatpush2.msra.mxu0 0.0
        %282 = vmatprep.subr.mxu0 0.0
        %283 = vmatpush2.msra.mxu0 0.0
        %284 = vmatprep.subr.mxu0 0.0
        %285 = vmatpush2.msra.mxu0 0.0
        %286 = vmatprep.subr.mxu0 0.0
        %287 = vmatpush2.msra.mxu0 0.0
        %288 = vmatprep.subr.mxu0 0.0
        %289 = vmatpush2.msra.mxu0 0.0
        %290 = vmatprep.subr.mxu0 0.0
        %291 = vmatpush2.msra.mxu0 0.0
        %292 = vmatprep.subr.mxu0 0.0
        %293 = vmatpush2.msra.mxu0 0.0
        %294 = vmatprep.subr.mxu0 0.0
        %295 = vmatpush2.msra.mxu0 0.0
        %296 = vmatprep.subr.mxu0 0.0
        %297 = vmatpush2.msra.mxu0 0.0
        %298 = vmatprep.mubr.f32.mxu0 0.0
        %299 = vmatmul.mubr.f32.gmra.mxu0 %v217
        %v300 = vpop.f32.mrf.mxu0
        %v301 = vadd.f32 0.0, %v300
        %v302 = vpop.f32.mrf.mxu0
        %303 = vdwg.mxu0
        %v304 = vmul.f32 %v301, 0.0625
        %v305 = vlaneseq
        %v306 = vshrl.u32 %v305, 7
        %v307 = vsub.s32 0, %v306
        %v308 = vrot.slane %v304, %v307
        %v309 = vsub.f32 %v209, %v308
        %v310 = vmul.f32 %v309, %v309
        %v311 = vsel %vm210, %v310, 0.0
        %v312 = vrot.slane %v311, 4
        %v313 = vadd.f32 %v311, %v312
        %v314 = vrot.slane %v313, 2
        %v315 = vadd.f32 %v313, %v314
        %v316 = vrot.slane %v315, 1
        %v317 = vadd.f32 %v315, %v316
        %318 = vmatprep.subr.mxu0 0.0
        %319 = vmatpush1.msra.mxu0 %v233
        %320 = vmatprep.subr.mxu0 0.0
        %321 = vmatpush1.msra.mxu0 %v232
        %322 = vmatprep.subr.mxu0 0.0
        %323 = vmatpush1.msra.mxu0 %v231
        %324 = vmatprep.subr.mxu0 0.0
        %325 = vmatpush1.msra.mxu0 %v230
        %326 = vmatprep.subr.mxu0 0.0
        %327 = vmatpush1.msra.mxu0 %v229
        %328 = vmatprep.subr.mxu0 0.0
        %329 = vmatpush1.msra.mxu0 %v228
        %330 = vmatprep.subr.mxu0 0.0
        %331 = vmatpush1.msra.mxu0 %v227
        %332 = vmatprep.subr.mxu0 0.0
        %333 = vmatpush1.msra.mxu0 %v226
        %334 = vmatprep.subr.mxu0 0.0
        %335 = vmatpush1.msra.mxu0 %v225
        %336 = vmatprep.subr.mxu0 0.0
        %337 = vmatpush1.msra.mxu0 %v224
        %338 = vmatprep.subr.mxu0 0.0
        %339 = vmatpush1.msra.mxu0 %v223
        %340 = vmatprep.subr.mxu0 0.0
        %341 = vmatpush1.msra.mxu0 %v222
        %342 = vmatprep.subr.mxu0 0.0
        %343 = vmatpush1.msra.mxu0 %v221
        %344 = vmatprep.subr.mxu0 0.0
        %345 = vmatpush1.msra.mxu0 %v220
        %346 = vmatprep.subr.mxu0 0.0
        %347 = vmatpush1.msra.mxu0 %v219
        %348 = vmatprep.subr.mxu0 0.0
        %349 = vmatpush1.msra.mxu0 %v218
        %350 = vmatprep.subr.mxu0 0.0
        %351 = vmatpush2.msra.mxu0 0.0
        %352 = vmatprep.subr.mxu0 0.0
        %353 = vmatpush2.msra.mxu0 0.0
        %354 = vmatprep.subr.mxu0 0.0
        %355 = vmatpush2.msra.mxu0 0.0
        %356 = vmatprep.subr.mxu0 0.0
        %357 = vmatpush2.msra.mxu0 0.0
        %358 = vmatprep.subr.mxu0 0.0
        %359 = vmatpush2.msra.mxu0 0.0
        %360 = vmatprep.subr.mxu0 0.0
        %361 = vmatpush2.msra.mxu0 0.0
        %362 = vmatprep.subr.mxu0 0.0
        %363 = vmatpush2.msra.mxu0 0.0
        %364 = vmatprep.subr.mxu0 0.0
        %365 = vmatpush2.msra.mxu0 0.0
        %366 = vmatprep.subr.mxu0 0.0
        %367 = vmatpush2.msra.mxu0 0.0
        %368 = vmatprep.subr.mxu0 0.0
        %369 = vmatpush2.msra.mxu0 0.0
        %370 = vmatprep.subr.mxu0 0.0
        %371 = vmatpush2.msra.mxu0 0.0
        %372 = vmatprep.subr.mxu0 0.0
        %373 = vmatpush2.msra.mxu0 0.0
        %374 = vmatprep.subr.mxu0 0.0
        %375 = vmatpush2.msra.mxu0 0.0
        %376 = vmatprep.subr.mxu0 0.0
        %377 = vmatpush2.msra.mxu0 0.0
        %378 = vmatprep.subr.mxu0 0.0
        %379 = vmatpush2.msra.mxu0 0.0
        %380 = vmatprep.subr.mxu0 0.0
        %381 = vmatpush2.msra.mxu0 0.0
        %382 = vmatprep.mubr.f32.mxu0 0.0
        %383 = vmatmul.mubr.f32.gmra.mxu0 %v317
        %v384 = vpop.f32.mrf.mxu0
        %v385 = vadd.f32 0.0, %v384
        %v386 = vpop.f32.mrf.mxu0
        %387 = vdwg.mxu0
        %p388 = scmp.eq.s32.totalorder %s20, 0
        // Predicated region
        $region41: #{batch_norm_1d.1} parent=39 // pred_check
          %p389 = pneg %p388
        $region42: #{batch_norm_1d.1} parent=39 // pred_check_branch
          %391 = sbr.rel (%p389) target = $region44
        $region43: #{batch_norm_1d.1} parent=39 // pred_region
          %392 = vst [vmem:[#allocation2] sm:$0x1] %v304
          %393 = vst [vmem:[#allocation3] sm:$0x1] %v385
        $region44: #{batch_norm_1d.1} parent=39 // pred_fallthru
          _
        %p394 = scmp.gt.s32.totalorder %s20, 0
        // Predicated region
        $region45: #{batch_norm_1d.1} parent=39 // pred_check
          %p395 = pneg %p394
        $region46: #{batch_norm_1d.1} parent=39 // pred_check_branch
          %397 = sbr.rel (%p395) target = $region48
        $region47: #{batch_norm_1d.1} parent=39 // pred_region
          %s398 = scvt.s32.f32 %s20
          %s399 = smul.f32 %s398, 16.0
          %s400 = sadd.f32 %s399, 16.0
          %v401 = vld [vmem:[#allocation2] sm:$0x1]
          %v402 = vsub.f32 %v304, %v401
          %v403 = vstv %s400
          %v404 = vrcp.pop %v403
          %s405 = vtos %v404
          %s406 = smul.f32 16.0, %s405
          %v407 = vstv %s406
          %v408 = vmul.f32 %v402, %v407
          %v409 = vadd.f32 %v401, %v408
          %410 = vst [vmem:[#allocation2] sm:$0x1] %v409
          %v411 = vld [vmem:[#allocation3] sm:$0x1]
          %v412 = vadd.f32 %v411, %v385
          %v413 = vmul.f32 %v402, %v402
          %s414 = smul.f32 %s399, %s406
          %v415 = vstv %s414
          %v416 = vmul.f32 %v413, %v415
          %v417 = vadd.f32 %v412, %v416
          %418 = vst [vmem:[#allocation3] sm:$0x1] %v417
        $region48: #{batch_norm_1d.1} parent=39 // pred_fallthru
          _
      $region40: #{batch_norm_1d.1} parent=35 // pred_fallthru
        _
      %p419 = scmp.eq.s32.totalorder %s19, 1
      // Predicated region
      $region49: #{batch_norm_1d.1} parent=35 // pred_check
        %p420 = pneg %p419
      $region50: #{batch_norm_1d.1} parent=35 // pred_check_branch
        %422 = sbr.rel (%p420) target = $region52
      $region51: #{batch_norm_1d.1} parent=35 // pred_region
        %v423 = vld [vmem:[%s200] sm:$0xf]
        %v424 = vld [vmem:[#allocation3] sm:$0x1]
        %v425 = vmul.f32 %v424, 0.0625
        %v426 = vadd.f32 %v425, 1e-05
        %v427 = vrsqrt.pop %v426
        %v428 = vld [vmem:[#allocation2] sm:$0x1]
        %v430 = vlaneseq
        %v431 = vshrl.u32 %v430, 7
        %v432 = vsub.s32 0, %v431
        %v433 = vrot.slane %v428, %v432
        %v435 = vsub.f32 %v423, %v433
        %v437 = vlaneseq
        %v438 = vshrl.u32 %v437, 7
        %v439 = vsub.s32 0, %v438
        %v440 = vrot.slane %v427, %v439
        %v442 = vmul.f32 %v435, %v440
        %v443 = vld [vmem:[%s1] sm:$0x1]
        %v445 = vlaneseq
        %v446 = vshrl.u32 %v445, 7
        %v447 = vsub.s32 0, %v446
        %v448 = vrot.slane %v443, %v447
        %v450 = vmul.f32 %v442, %v448
        %v451 = vld [vmem:[%s2] sm:$0x1]
        %v453 = vlaneseq
        %v454 = vshrl.u32 %v453, 7
        %v455 = vsub.s32 0, %v454
        %v456 = vrot.slane %v451, %v455
        %v458 = vadd.f32 %v450, %v456
        %459 = vst [vmem:[%s204] sm:$0xf] %v458
      $region52: #{batch_norm_1d.1} parent=35 // pred_fallthru
        _
      %p460 = scmp.lt.s32.totalorder %s20, 0
      %s461 = scalar_select %p460, %s20, 0
      %s462 = smul.addr %s461, 4
      %s463 = scalar_lea.vmem %s4, %s462
      // Predicated region
      $region53: #{batch_norm_1d.1} parent=35 // pred_check
        %p464 = pneg %p134
      $region54: #{batch_norm_1d.1} parent=35 // pred_check_branch
        %466 = sbr.rel (%p464) target = $region56
      $region55: #{batch_norm_1d.1} parent=35 // pred_region
        _
      $region56: #{batch_norm_1d.1} parent=35 // pred_fallthru
        _
      // Predicated region
      $region57: #{batch_norm_1d.1} parent=35 // pred_check
        %p467 = pneg %p134
      $region58: #{batch_norm_1d.1} parent=35 // pred_check_branch
        %469 = sbr.rel (%p467) target = $region60
      $region59: #{batch_norm_1d.1} parent=35 // pred_region
        %p470 = scmp.lt.s32.totalorder %s20, 0
        %s471 = scalar_select %p470, %s20, 0
        %s472 = smul.addr %s471, 4
        %s473 = scalar_lea.vmem %s4, %s472
      $region60: #{batch_norm_1d.1} parent=35 // pred_fallthru
        _
    $region36: #{batch_norm_1d.1} parent=5 // pred_fallthru
      _
    %p474 = scmp.le.s32.totalorder 2, %s10
    // Predicated region
    $region61: #{batch_norm_1d.1} parent=5 // pred_check
      %p475 = pneg %p474
    $region62: #{batch_norm_1d.1} parent=5 // pred_check_branch
      %477 = sbr.rel (%p475) target = $region64
    $region63: #{batch_norm_1d.1} parent=5 // pred_region
      %s478 = ssub.s32 %s10, 2
    $region64: #{batch_norm_1d.1} parent=5 // pred_fallthru
      _
  $region6: #{batch_norm_1d.1} parent=0 // loop_footer
    %s14 = sadd.s32 1, %s10
  $region7: #{batch_norm_1d.1} parent=0 // loop_footer_branch
    %9 = sbr.rel target = $region3
  $region8: #{batch_norm_1d.1} parent=0 // loop_exit
    _

</llo_original>
